<compile_context>
chip_gen: v7x
topology: tpu7x:2x2x1
jax: 0.10.0
libtpu: 0.0.40
codegen_flags: <defaults>
</compile_context>

<pallas_src>
import functools

import jax
import jax.numpy as jnp
import numpy as np
from jax.experimental import pallas as pl
from jax.experimental.pallas import tpu as pltpu


def _rope_kernel(inv_freq_ref, lane_off_ref, cos_ref, sin_ref, *, pack, duplicate):
    """Writes one (block_rows, out_w) tile of the cos/sin tables.

    inv_freq_ref : (1, cw) f32  per-lane inverse frequency
    lane_off_ref : (1, cw) f32  per-lane position offset within a packed row
    cos/sin_ref  : (block_rows, out_w), out_w = 2*cw if duplicate else cw
    """
    block_rows = cos_ref.shape[0]
    cw = inv_freq_ref.shape[1]
    row0 = pl.program_id(0) * block_rows

    inv_freq = inv_freq_ref[...]                                   # (1, cw)
    lane_off = lane_off_ref[...]                                   # (1, cw)

    # Per-tile row positions: tiny (block_rows, 1) column, negligible VALU cost.
    r = jax.lax.broadcasted_iota(jnp.int32, (block_rows, 1), 0)
    pos_base = (row0 * pack + r * pack).astype(jnp.float32)        # (blk, 1)

    # One f32 add + one f32 mul per element; operands match the reference outer
    # product exactly (positions are exact int-valued f32), so the only residual
    # error vs the torch cache is the cos/sin implementation itself.
    pos = pos_base + lane_off                                      # (blk, cw)
    freqs = pos * inv_freq                                         # (blk, cw)

    c = jnp.cos(freqs).astype(cos_ref.dtype)
    s = jnp.sin(freqs).astype(sin_ref.dtype)

    if duplicate:
        # dim >= 256: half-width transcendentals, duplicated via two lane-aligned
        # sub-slice stores (cw % 128 == 0 -> unmasked full-width vst, no
        # concatenate temporary).
        cos_ref[:, :cw] = c
        cos_ref[:, cw:] = c
        sin_ref[:, :cw] = s
        sin_ref[:, cw:] = s
    else:
        cos_ref[...] = c
        sin_ref[...] = s


def _host_freq_tables(dim, half, pack, cw, base, duplicate):
    """(1, cw) f32 inv_freq-per-lane and position-offset-per-lane rows.

    Computed in float64 then cast, so the f32 values match (to <=1 ULP) the
    reference 1/base**(2j/dim) instead of an exp()-reconstruction.
    """
    inv_freq64 = 1.0 / (float(base) ** (np.arange(0, dim, 2, dtype=np.float64) / dim))
    if duplicate:
        inv_lane = inv_freq64                       # (half,) == (cw,)
        lane_off = np.zeros((cw,), np.float64)
    else:
        lane = np.arange(cw)
        j = (lane % dim) % half                     # frequency index of each lane
        inv_lane = inv_freq64[j]
        lane_off = (lane // dim).astype(np.float64)  # position offset within packed row
    return (jnp.asarray(inv_lane.astype(np.float32)[None, :]),
            jnp.asarray(lane_off.astype(np.float32)[None, :]))


def llama_rotary_embedding(x, seq_len, *, dim, base=10000, block_rows=1024):
    """Returns (cos, sin), each of shape (1, 1, seq_len, dim), dtype = x.dtype."""
    assert dim % 2 == 0
    out_dtype = x.dtype
    itemsize = jnp.dtype(out_dtype).itemsize
    half = dim // 2

    # Lane-dense packing: pack consecutive positions side by side so the stored
    # last dim is >= 128 lanes (unmasked stores).  seq_len that is not a multiple
    # of pack is padded up and sliced afterwards (never fall back to a <128-lane
    # masked-store layout).
    if dim < 128 and 128 % dim == 0:
        pack = 128 // dim
    else:
        pack = 1                                     # dim >= 128 (or dim !| 128: rare, masked)
    w = pack * dim
    s_packed = pl.cdiv(seq_len, pack)                # packed rows (padded up)
    seq_pad = s_packed * pack

    # dim >= 256: unique half-width freqs are already lane-dense -> compute cos/sin
    # once on (blk, half) and duplicate with two sub-slice stores.
    duplicate = (pack == 1 and half % 128 == 0)
    cw = half if duplicate else w

    # Tile rows: large tiles amortize the ~0.35us/step overhead (sweep: 1024 ~ 86%
    # of HBM roofline).  Guard v5e's 16 MiB scoped-VMEM default: double-buffered
    # output bytes = 2 outputs x 2 bufs x block_rows x w x itemsize.
    vmem_budget = 8 * 1024 * 1024
    max_rows_vmem = max(32, ((vmem_budget // (4 * w * itemsize)) // 32) * 32)
    block_rows = min(block_rows, max_rows_vmem)
    if block_rows >= s_packed:
        block_rows = s_packed            # single block == full extent (always legal)
    else:
        block_rows = max(32, (block_rows // 32) * 32)  # keep sub-32-bit outputs packed
    grid = (pl.cdiv(s_packed, block_rows),)
    # Long sequences (s_packed >= 2*block_rows) get >= 2 grid steps, letting
    # dimension_semantics=("parallel",) shard across v7x's two TensorCores; short
    # sequences keep a single step so per-step overhead never dominates.

    inv_lane, lane_off = _host_freq_tables(dim, half, pack, cw, base, duplicate)

    kernel = functools.partial(_rope_kernel, pack=pack, duplicate=duplicate)
    cost = pl.CostEstimate(
        flops=6 * seq_pad * dim,
        transcendentals=2 * seq_pad * dim,
        bytes_accessed=2 * seq_pad * dim * itemsize,
    )

    cos_p, sin_p = pl.pallas_call(
        kernel,
        out_shape=(
            jax.ShapeDtypeStruct((s_packed, w), out_dtype),
            jax.ShapeDtypeStruct((s_packed, w), out_dtype),
        ),
        grid_spec=pltpu.PrefetchScalarGridSpec(
            num_scalar_prefetch=0,
            grid=grid,
            in_specs=[
                pl.BlockSpec((1, cw), lambda i: (0, 0)),   # tiny, full extent
                pl.BlockSpec((1, cw), lambda i: (0, 0)),
            ],
            out_specs=[
                pl.BlockSpec((block_rows, w), lambda i: (i, 0)),
                pl.BlockSpec((block_rows, w), lambda i: (i, 0)),
            ],
        ),
        compiler_params=pltpu.CompilerParams(
            dimension_semantics=("parallel",)),
        cost_estimate=cost,
    )(inv_lane, lane_off)

    # Row-major (s_packed, pack*dim) is byte-identical to (seq_pad, dim): the
    # reshape is free; slice drops any pack-padding rows; leading (1, 1) dims
    # mirror the torch cached buffers.
    cos2d = cos_p.reshape(seq_pad, dim)[:seq_len]
    sin2d = sin_p.reshape(seq_pad, dim)[:seq_len]
    return cos2d[None, None, :, :], sin2d[None, None, :, :]


def _reference(x, seq_len, dim, base=10000):
    inv_freq = 1.0 / (base ** (np.arange(0, dim, 2, dtype=np.float32) / dim))
    t = np.arange(seq_len, dtype=np.float32)
    freqs = np.einsum("i,j->ij", t, inv_freq.astype(np.float32))
    emb = np.concatenate([freqs, freqs], axis=-1)
    dtype = np.asarray(x).dtype
    return np.cos(emb)[None, None].astype(dtype), np.sin(emb)[None, None].astype(dtype)


def _check(x, seq_len, dim, *, rtol, atol):
    cos, sin = llama_rotary_embedding(x, seq_len, dim=dim)
    cos, sin = jax.block_until_ready((cos, sin))
    cos_ref, sin_ref = _reference(x, seq_len, dim)
    np.testing.assert_allclose(np.asarray(cos).astype(np.float32),
                               cos_ref.astype(np.float32), rtol=rtol, atol=atol)
    np.testing.assert_allclose(np.asarray(sin).astype(np.float32),
                               sin_ref.astype(np.float32), rtol=rtol, atol=atol)
    assert cos.shape == (1, 1, seq_len, dim) and sin.shape == (1, 1, seq_len, dim)
    assert cos.dtype == x.dtype and sin.dtype == x.dtype


if __name__ == "__main__":
    key = jax.random.PRNGKey(0)

    # Primary small-shape example (x supplies only dtype, as in the torch module).
    batch, n_heads, seq_len, head_dim = 2, 4, 16, 64
    x = jax.random.normal(key, (batch, n_heads, seq_len, head_dim), dtype=jnp.float32)
    _check(x, seq_len, head_dim, rtol=1e-5, atol=1e-5)

    # Odd seq_len with head_dim 64: exercises the pack-padding + slice path.
    x_odd = jax.random.normal(key, (1, 1, 17, 64), dtype=jnp.float32)
    _check(x_odd, 17, 64, rtol=1e-5, atol=1e-4)

    # Longer sequence: lane-dense packing (head_dim 64 -> 128-wide slab), 1024-row
    # tiles, 2-step grid.  Host-precomputed inv_freq keeps long-context parity tight.
    x_long = jax.random.normal(key, (1, 1, 2048, 64), dtype=jnp.float32)
    _check(x_long, 2048, 64, rtol=1e-4, atol=2e-3)

    # bfloat16 output dtype, head_dim=128 (full-width path).
    x_bf16 = jax.random.normal(key, (1, 1, 1024, 128), dtype=jnp.bfloat16)
    _check(x_bf16, 1024, 128, rtol=1e-2, atol=2e-2)

    # dim >= 256 exercises the half-width transcendentals + sub-slice-store path.
    x_wide = jax.random.normal(key, (1, 1, 512, 256), dtype=jnp.float32)
    _check(x_wide, 512, 256, rtol=1e-4, atol=1e-3)

    print("KERNEL_OK")
</pallas_src>

<mosaic_0001>
module attributes {stable_mosaic.version = 11 : i64} {
  func.func @_rope_kernel(%arg0: i32, %arg1: memref<1x128xf32, #tpu.memory_space<vmem>>, %arg2: memref<1x128xf32, #tpu.memory_space<vmem>>, %arg3: memref<8x128xf32, #tpu.memory_space<vmem>>, %arg4: memref<8x128xf32, #tpu.memory_space<vmem>>) attributes {dimension_semantics = [#tpu.dimension_semantics<parallel>], iteration_bounds = array<i64: 1>, scalar_prefetch = 0 : i64, scratch_operands = 0 : i64, tpu.core_type = #tpu.core_type<tc>, window_params = [{pipeline_mode = #tpu.pipeline_mode<synchronous>, transform_indices = @transform_0, window_bounds = array<i64: 1, 128>}, {pipeline_mode = #tpu.pipeline_mode<synchronous>, transform_indices = @transform_1, window_bounds = array<i64: 1, 128>}, {transform_indices = @transform_2, window_bounds = array<i64: 8, 128>}, {transform_indices = @transform_3, window_bounds = array<i64: 8, 128>}]} {
    %c8_i32 = arith.constant 8 : i32
    %0 = arith.muli %arg0, %c8_i32 : i32
    %c0 = arith.constant 0 : index
    %c0_0 = arith.constant 0 : index
    %1 = vector.load %arg1[%c0, %c0_0] : memref<1x128xf32, #tpu.memory_space<vmem>>, vector<1x128xf32>
    %c0_1 = arith.constant 0 : index
    %c0_2 = arith.constant 0 : index
    %2 = vector.load %arg2[%c0_1, %c0_2] : memref<1x128xf32, #tpu.memory_space<vmem>>, vector<1x128xf32>
    %3 = tpu.iota {dimensions = array<i32: 0>} : vector<8x1xi32>
    %c2_i32 = arith.constant 2 : i32
    %4 = arith.muli %0, %c2_i32 : i32
    %c2_i32_3 = arith.constant 2 : i32
    %5 = vector.broadcast %c2_i32_3 : i32 to vector<8x1xi32>
    %6 = arith.muli %3, %5 : vector<8x1xi32>
    %7 = vector.broadcast %4 : i32 to vector<8x1xi32>
    %8 = arith.addi %7, %6 : vector<8x1xi32>
    %9 = arith.sitofp %8 : vector<8x1xi32> to vector<8x1xf32>
    %10 = vector.broadcast %9 : vector<8x1xf32> to vector<8x128xf32>
    %11 = vector.broadcast %2 : vector<1x128xf32> to vector<8x128xf32>
    %12 = arith.addf %10, %11 : vector<8x128xf32>
    %13 = vector.broadcast %1 : vector<1x128xf32> to vector<8x128xf32>
    %14 = arith.mulf %12, %13 : vector<8x128xf32>
    %15 = math.cos %14 : vector<8x128xf32>
    %16 = math.sin %14 : vector<8x128xf32>
    %c0_4 = arith.constant 0 : index
    %c0_5 = arith.constant 0 : index
    %17 = vector.load %arg3[%c0_4, %c0_5] : memref<8x128xf32, #tpu.memory_space<vmem>>, vector<8x128xf32>
    tpu.vector_store %arg3[%c0_4, %c0_5], %15 {strides = array<i32>} : memref<8x128xf32, #tpu.memory_space<vmem>>, vector<8x128xf32>,
    %c0_6 = arith.constant 0 : index
    %c0_7 = arith.constant 0 : index
    %18 = vector.load %arg4[%c0_6, %c0_7] : memref<8x128xf32, #tpu.memory_space<vmem>>, vector<8x128xf32>
    tpu.vector_store %arg4[%c0_6, %c0_7], %16 {strides = array<i32>} : memref<8x128xf32, #tpu.memory_space<vmem>>, vector<8x128xf32>,
    return
  }
  func.func @transform_0(%arg0: i32) -> (i32, i32) {
    %c0_i32 = arith.constant 0 : i32
    %c0_i32_0 = arith.constant 0 : i32
    %c0_i32_1 = arith.constant 0 : i32
    return %c0_i32, %c0_i32_0 : i32, i32
  }
  func.func @transform_1(%arg0: i32) -> (i32, i32) {
    %c0_i32 = arith.constant 0 : i32
    %c0_i32_0 = arith.constant 0 : i32
    %c0_i32_1 = arith.constant 0 : i32
    return %c0_i32, %c0_i32_0 : i32, i32
  }
  func.func @transform_2(%arg0: i32) -> (i32, i32) {
    %c0_i32 = arith.constant 0 : i32
    %c0_i32_0 = arith.constant 0 : i32
    return %arg0, %c0_i32 : i32, i32
  }
  func.func @transform_3(%arg0: i32) -> (i32, i32) {
    %c0_i32 = arith.constant 0 : i32
    %c0_i32_0 = arith.constant 0 : i32
    return %arg0, %c0_i32 : i32, i32
  }
}

</mosaic_0001>

<llo_original>
// kernel: tpu_custom_call.1
$region0: #{tpu_custom_call.1}
  #allocation0 [shape = 'u32[]', space=smem, size = 0x4, offset = 0x4, fixed_abs, tag = 'smem constant byte address 0x4 - core index']
  #allocation1 [shape = 'u32[144,128]{1,0:T(1,128)}', space=vmem, size = 0x12000, scoped, tag = 'internal scratch']
  %s0 = inlined_call_operand.hbm [shape: f32[1,128], index: 0, kind: input, shape index: {}]
  %s1 = inlined_call_operand.vmem [shape: f32[1,128], index: 1, kind: input, shape index: {}]
  %s2 = inlined_call_operand.hbm [shape: f32[8,128], index: 2, kind: output, shape index: {0}]
  %s3 = inlined_call_operand.hbm [shape: f32[8,128], index: 3, kind: output, shape index: {1}]
  %4 = xla_tuple %s2, %s3
  %s5 = sld [smem:[#allocation0]]
  $region30: #{tpu_custom_call.1} parent=0
    _
  %s7 = ssub.s32 1, %s5
  %s8 = scalar_select 0, %s7, %s5
  $region1: #{tpu_custom_call.1} parent=0
    #allocation2 [shape = 'u8[512]{0}', space=vmem, size = 0x400, scoped, tag = 'input window, operand 0, single buffered']
    #allocation3 [shape = 's32[1]{0}', space=sflag, size = 0x4, scoped, tag = 'scoped memory for tpu_custom_call.1']
    #allocation4 [shape = 's32[1]{0}', space=sflag, size = 0x4, scoped, tag = 'scoped memory for tpu_custom_call.1']
    #allocation5 [shape = 'u8[4096]{0}', space=vmem, size = 0x1000, scoped, tag = 'output window, operand 0, single buffered']
    #allocation6 [shape = 'u8[4096]{0}', space=vmem, size = 0x1000, scoped, tag = 'output window, operand 1, single buffered']
    #allocation7 [shape = 's32[1]{0}', space=sflag, size = 0x4, scoped, tag = 'scoped memory for tpu_custom_call.1']
    %9 = vsyncpa [#allocation3], 0
    %10 = vsyncpa [#allocation4], 0
    %11 = vsyncpa [#allocation7], 0
    // Predicated region
    $region2: #{tpu_custom_call.1} parent=1 // pred_check
      _
    $region3: #{tpu_custom_call.1} parent=1 // pred_check_branch
      %13 = sbr.rel (0) target = $region5
    $region4: #{tpu_custom_call.1} parent=1 // pred_region
      %s15 = ssub.s32 16, 16
      %16 = vsyncadd [#allocation3], %s15
      %s18 = sshll.u32 [#allocation2], 4
      %s19 = int_to_ptr.vmem [resolvable:$true] %s18
      %21 = dma.hbm_to_vmem [thread:$0]  %s0, 16, %s19, [#allocation3]
    $region5: #{tpu_custom_call.1} parent=1 // pred_fallthru
      _
    // Predicated region
    $region6: #{tpu_custom_call.1} parent=1 // pred_check
      _
    $region7: #{tpu_custom_call.1} parent=1 // pred_check_branch
      %23 = sbr.rel (0) target = $region9
    $region8: #{tpu_custom_call.1} parent=1 // pred_region
      _
    $region9: #{tpu_custom_call.1} parent=1 // pred_fallthru
      _
    // Predicated region
    $region10: #{tpu_custom_call.1} parent=1 // pred_check
      _
    $region11: #{tpu_custom_call.1} parent=1 // pred_check_branch
      %25 = sbr.rel (0) target = $region13
    $region12: #{tpu_custom_call.1} parent=1 // pred_region
      %26 = dma.done [#allocation3], 16
    $region13: #{tpu_custom_call.1} parent=1 // pred_fallthru
      _
    %v27 = vld [vmem:[#allocation2] sm:$0x1]
    %v28 = vld [vmem:[%s1] sm:$0x1]
    %v29 = vlaneseq
    %v30 = vshrl.u32 %v29, 7
    %s31 = smul.u32 0, 16
    %v32 = vmul.u32 %v30, 2
    %v33 = vstv %s31
    %v34 = vadd.s32 %v33, %v32
    %v35 = vcvt.s32.f32 %v34
    %v37 = vlaneseq
    %v38 = vshrl.u32 %v37, 7
    %v39 = vsub.s32 0, %v38
    %v40 = vrot.slane %v28, %v39
    %v42 = vadd.f32 %v35, %v40
    %v44 = vlaneseq
    %v45 = vshrl.u32 %v44, 7
    %v46 = vsub.s32 0, %v45
    %v47 = vrot.slane %v27, %v46
    %v49 = vmul.f32 %v42, %v47
    %v50 = vand.u32 2147483647, %v49
    %vm51 = vcmp.le.f32.partialorder %v50, 0.7853982
    %vm52 = vcmp.lt.s32.totalorder %v49, 0
    %v53 = vand.u32 %v49, 2139095040
    %v54 = vshrl.u32 %v53, 23
    %v55 = vsub.s32 %v54, 127
    %v56 = vand.u32 2147483647, %v49
    %v57 = vand.u32 %v56, 8388607
    %v58 = vor.u32 %v57, 8388608
    %v59 = vsub.s32 0, %v58
    %v60 = vadd.s32 %v55, 1
    %vm61 = vcmp.gt.s32.totalorder %v60, 0
    %v62 = vsel %vm61, %v60, 0
    %v63 = vshrl.u32 %v62, 5
    %v64 = vand.u32 %v62, 31
    %v65 = vsub.s32 32, %v64
    %v66 = vshrl.u32 683565275, %v65
    %v67 = vshll.u32 683565275, %v64
    %v68 = vshrl.u32 2475754826, %v65
    %v69 = vor.u32 %v67, %v68
    %v70 = vshll.u32 2475754826, %v64
    %v71 = vshrl.u32 2131351028, %v65
    %v72 = vor.u32 %v70, %v71
    %v73 = vshll.u32 2131351028, %v64
    %v74 = vshrl.u32 2102212464, %v65
    %v75 = vor.u32 %v73, %v74
    %v76 = vshll.u32 2102212464, %v64
    %v77 = vshrl.u32 920167782, %v65
    %v78 = vor.u32 %v76, %v77
    %v79 = vshll.u32 920167782, %v64
    %v80 = vshrl.u32 1326507024, %v65
    %v81 = vor.u32 %v79, %v80
    %vm82 = vcmp.lt.s32.totalorder %v63, 1
    %vm83 = vcmp.lt.s32.totalorder %v63, 2
    %vm84 = vcmp.lt.s32.totalorder %v63, 3
    %vm85 = vcmp.lt.s32.totalorder %v63, 4
    %v86 = vsel %vm82, %v66, %v69
    %v87 = vsel %vm85, %v75, 2102212464
    %v88 = vsel %vm84, %v72, %v87
    %v89 = vsel %vm83, %v86, %v88
    %v90 = vsel %vm82, %v69, %v72
    %v91 = vsel %vm85, %v78, 920167782
    %v92 = vsel %vm84, %v75, %v91
    %v93 = vsel %vm83, %v90, %v92
    %v94 = vsel %vm82, %v72, %v75
    %v95 = vsel %vm85, %v81, 1326507024
    %v96 = vsel %vm84, %v78, %v95
    %v97 = vsel %vm83, %v94, %v96
    %v98 = vshll.u32 %v58, 8
    %v99 = vmul.u32.u64.compose %v98, %v97
    %v100 = vextract.low.u32 %v99
    %v101 = vextract.high.u32 %v99
    %v102 = vmul.u32.u64.compose %v98, %v93
    %v103 = vextract.low.u32 %v102
    %v104 = vextract.high.u32 %v102
    %v105 = vmul.u32 %v98, %v89
    %v106 = vadd.s32 %v101, %v103
    %vm107 = vc.u32 %v101, %v103
    %v108 = vadd.s32 %v104, 1
    %v109 = vsel %vm107, %v108, %v104
    %v110 = vadd.s32 %v105, %v109
    %v111 = vadd.s32 %v110, 536870912
    %v112 = vshrl.u32 %v111, 30
    %v113 = vshll.u32 %v112, 30
    %v114 = vsub.s32 %v110, %v113
    %vm115 = vcmp.lt.s32.totalorder %v114, 0
    %v116 = vsub.s32 0, %v114
    %v117 = vsel %vm115, %v116, %v114
    %v118 = vclz %v117
    %v119 = vsub.s32 %v118, 2
    %vm120 = vcmp.gt.s32.totalorder 0, %v119
    %v121 = vsel %vm120, 0, %v119
    %v122 = vsub.s32 32, %v121
    %v123 = vshll.u32 %v114, %v121
    %v124 = vshrl.u32 %v106, %v122
    %v125 = vor.u32 %v123, %v124
    %v126 = vsub.s32 4294967266, %v121
    %v127 = vadd.s32 %v126, 127
    %v128 = vshll.u32 %v127, 23
    %v129 = vor.u32 4788187, %v128
    %v130 = vand.u32 2147483647, %v129
    %v132 = vcvt.s32.f32 %v125
    %v133 = vmul.f32 %v132, %v130
    %v134 = vxor.u32 %v133, 2147483648
    %v135 = vsel %vm52, %v134, %v133
    %v136 = vsub.s32 4, %v112
    %v137 = vsel %vm52, %v136, %v112
    %v138 = vsel %vm51, %v49, %v135
    %v139 = vsel %vm51, 0, %v137
    %v140 = vcosq.f32.pop %v138
    %v141 = vsinq.f32.pop %v138
    %vm142 = vweird.f32 %v49
    %v143 = vand.u32 %v139, 3
    %vm144 = vcmp.lt.s32.totalorder %v143, 2
    %vm145 = vcmp.eq.s32.totalorder %v143, 0
    %v146 = vxor.u32 %v141, 2147483648
    %v147 = vsel %vm145, %v140, %v146
    %vm148 = vcmp.eq.s32.totalorder %v143, 2
    %v149 = vxor.u32 %v140, 2147483648
    %v150 = vsel %vm148, %v149, %v141
    %v151 = vsel %vm144, %v147, %v150
    %v152 = vsel %vm142, nan, %v151
    %v153 = vand.u32 2147483647, %v49
    %vm154 = vcmp.le.f32.partialorder %v153, 0.7853982
    %vm155 = vcmp.lt.s32.totalorder %v49, 0
    %v156 = vand.u32 %v49, 2139095040
    %v157 = vshrl.u32 %v156, 23
    %v158 = vsub.s32 %v157, 127
    %v159 = vand.u32 2147483647, %v49
    %v160 = vand.u32 %v159, 8388607
    %v161 = vor.u32 %v160, 8388608
    %v162 = vsub.s32 0, %v161
    %v163 = vadd.s32 %v158, 1
    %vm164 = vcmp.gt.s32.totalorder %v163, 0
    %v165 = vsel %vm164, %v163, 0
    %v166 = vshrl.u32 %v165, 5
    %v167 = vand.u32 %v165, 31
    %v168 = vsub.s32 32, %v167
    %v169 = vshrl.u32 683565275, %v168
    %v170 = vshll.u32 683565275, %v167
    %v171 = vshrl.u32 2475754826, %v168
    %v172 = vor.u32 %v170, %v171
    %v173 = vshll.u32 2475754826, %v167
    %v174 = vshrl.u32 2131351028, %v168
    %v175 = vor.u32 %v173, %v174
    %v176 = vshll.u32 2131351028, %v167
    %v177 = vshrl.u32 2102212464, %v168
    %v178 = vor.u32 %v176, %v177
    %v179 = vshll.u32 2102212464, %v167
    %v180 = vshrl.u32 920167782, %v168
    %v181 = vor.u32 %v179, %v180
    %v182 = vshll.u32 920167782, %v167
    %v183 = vshrl.u32 1326507024, %v168
    %v184 = vor.u32 %v182, %v183
    %vm185 = vcmp.lt.s32.totalorder %v166, 1
    %vm186 = vcmp.lt.s32.totalorder %v166, 2
    %vm187 = vcmp.lt.s32.totalorder %v166, 3
    %vm188 = vcmp.lt.s32.totalorder %v166, 4
    %v189 = vsel %vm185, %v169, %v172
    %v190 = vsel %vm188, %v178, 2102212464
    %v191 = vsel %vm187, %v175, %v190
    %v192 = vsel %vm186, %v189, %v191
    %v193 = vsel %vm185, %v172, %v175
    %v194 = vsel %vm188, %v181, 920167782
    %v195 = vsel %vm187, %v178, %v194
    %v196 = vsel %vm186, %v193, %v195
    %v197 = vsel %vm185, %v175, %v178
    %v198 = vsel %vm188, %v184, 1326507024
    %v199 = vsel %vm187, %v181, %v198
    %v200 = vsel %vm186, %v197, %v199
    %v201 = vshll.u32 %v161, 8
    %v202 = vmul.u32.u64.compose %v201, %v200
    %v203 = vextract.low.u32 %v202
    %v204 = vextract.high.u32 %v202
    %v205 = vmul.u32.u64.compose %v201, %v196
    %v206 = vextract.low.u32 %v205
    %v207 = vextract.high.u32 %v205
    %v208 = vmul.u32 %v201, %v192
    %v209 = vadd.s32 %v204, %v206
    %vm210 = vc.u32 %v204, %v206
    %v211 = vadd.s32 %v207, 1
    %v212 = vsel %vm210, %v211, %v207
    %v213 = vadd.s32 %v208, %v212
    %v214 = vadd.s32 %v213, 536870912
    %v215 = vshrl.u32 %v214, 30
    %v216 = vshll.u32 %v215, 30
    %v217 = vsub.s32 %v213, %v216
    %vm218 = vcmp.lt.s32.totalorder %v217, 0
    %v219 = vsub.s32 0, %v217
    %v220 = vsel %vm218, %v219, %v217
    %v221 = vclz %v220
    %v222 = vsub.s32 %v221, 2
    %vm223 = vcmp.gt.s32.totalorder 0, %v222
    %v224 = vsel %vm223, 0, %v222
    %v225 = vsub.s32 32, %v224
    %v226 = vshll.u32 %v217, %v224
    %v227 = vshrl.u32 %v209, %v225
    %v228 = vor.u32 %v226, %v227
    %v229 = vsub.s32 4294967266, %v224
    %v230 = vadd.s32 %v229, 127
    %v231 = vshll.u32 %v230, 23
    %v232 = vor.u32 4788187, %v231
    %v233 = vand.u32 2147483647, %v232
    %v235 = vcvt.s32.f32 %v228
    %v236 = vmul.f32 %v235, %v233
    %v237 = vxor.u32 %v236, 2147483648
    %v238 = vsel %vm155, %v237, %v236
    %v239 = vsub.s32 4, %v215
    %v240 = vsel %vm155, %v239, %v215
    %v241 = vsel %vm154, %v49, %v238
    %v242 = vsel %vm154, 0, %v240
    %v243 = vcosq.f32.pop %v241
    %v244 = vsinq.f32.pop %v241
    %vm245 = vweird.f32 %v49
    %v246 = vadd.s32 %v242, 3
    %v247 = vand.u32 %v246, 3
    %vm248 = vcmp.lt.s32.totalorder %v247, 2
    %vm249 = vcmp.eq.s32.totalorder %v247, 0
    %v250 = vxor.u32 %v244, 2147483648
    %v251 = vsel %vm249, %v243, %v250
    %vm252 = vcmp.eq.s32.totalorder %v247, 2
    %v253 = vxor.u32 %v243, 2147483648
    %v254 = vsel %vm252, %v253, %v244
    %v255 = vsel %vm248, %v251, %v254
    %v256 = vsel %vm245, nan, %v255
    %257 = vst [vmem:[#allocation5] sm:$0xff] %v152
    %258 = vst [vmem:[#allocation6] sm:$0xff] %v256
    // Predicated region
    $region14: #{tpu_custom_call.1} parent=1 // pred_check
      _
    $region15: #{tpu_custom_call.1} parent=1 // pred_check_branch
      %260 = sbr.rel (0) target = $region17
    $region16: #{tpu_custom_call.1} parent=1 // pred_region
      %s262 = ssub.s32 128, 128
      %263 = vsyncadd [#allocation4], %s262
      %s265 = sshll.u32 [#allocation5], 4
      %s266 = int_to_ptr.vmem [resolvable:$true] %s265
      %268 = dma.vmem_to_hbm [thread:$0]  %s266, 128, %s2, [#allocation4]
    $region17: #{tpu_custom_call.1} parent=1 // pred_fallthru
      _
    // Predicated region
    $region18: #{tpu_custom_call.1} parent=1 // pred_check
      _
    $region19: #{tpu_custom_call.1} parent=1 // pred_check_branch
      %270 = sbr.rel (0) target = $region21
    $region20: #{tpu_custom_call.1} parent=1 // pred_region
      %s272 = ssub.s32 128, 128
      %273 = vsyncadd [#allocation7], %s272
      %s275 = sshll.u32 [#allocation6], 4
      %s276 = int_to_ptr.vmem [resolvable:$true] %s275
      %278 = dma.vmem_to_hbm [thread:$0]  %s276, 128, %s3, [#allocation7]
    $region21: #{tpu_custom_call.1} parent=1 // pred_fallthru
      _
    // Predicated region
    $region22: #{tpu_custom_call.1} parent=1 // pred_check
      _
    $region23: #{tpu_custom_call.1} parent=1 // pred_check_branch
      %280 = sbr.rel (0) target = $region25
    $region24: #{tpu_custom_call.1} parent=1 // pred_region
      %281 = dma.done [#allocation4], 128
    $region25: #{tpu_custom_call.1} parent=1 // pred_fallthru
      _
    // Predicated region
    $region26: #{tpu_custom_call.1} parent=1 // pred_check
      _
    $region27: #{tpu_custom_call.1} parent=1 // pred_check_branch
      %283 = sbr.rel (0) target = $region29
    $region28: #{tpu_custom_call.1} parent=1 // pred_region
      %284 = dma.done [#allocation7], 128
    $region29: #{tpu_custom_call.1} parent=1 // pred_fallthru
      _
    %285 = vsyncpa [#allocation3], 1
    %286 = vsyncpa [#allocation4], 1
    %287 = vsyncpa [#allocation7], 1

</llo_original>
